<compile_context>
chip_gen: v6e
topology: v6e:2x2x1
jax: 0.10.0
libtpu: 0.0.40
codegen_flags: <defaults>
</compile_context>

<pallas_src>
import jax
import jax.numpy as jnp
from jax.experimental import pallas as pl
from jax.experimental.pallas import tpu as pltpu

_SUBLANE = 8
_LANE = 128


def _mask_select_kernel(keep_ref, x_ref, out_ref):
    # keep_ref: (rb, 1); x_ref/out_ref: (rb, fb).  Per-row keep flag broadcast across
    # the lane axis; jnp.where (compare+select) so removed rows are exactly zero even
    # for NaN/Inf inputs (0 * NaN would propagate NaN).
    keep = keep_ref[...] != 0
    out_ref[...] = jnp.where(keep, x_ref[...], jnp.zeros_like(x_ref))


def _pick_blocks(rows, F, itemsize, max_block_bytes=12 * 1024 * 1024):
    """Pick (rb, fb): row/feature block sizes.

    fb is the full F (always a legal full-extent block) unless 8 rows of x would exceed
    the block budget, in which case fb is a multiple of 128 lanes.  rb is a multiple of
    8 sublanes, capped so the row grid has >= 2 blocks whenever rows > 8 (feeds both
    TensorCores on v7x; neutral on v5e/v6e).
    """
    if _SUBLANE * F * itemsize <= max_block_bytes:
        fb = F  # full-extent feature block (legal for any F, incl. non-multiples of 128)
    else:
        fb = max(_LANE, (max_block_bytes // (_SUBLANE * itemsize)) // _LANE * _LANE)

    rb = max_block_bytes // max(1, fb * itemsize)
    rb = max(_SUBLANE, (rb // _SUBLANE) * _SUBLANE)
    # Ensure >= 2 row blocks when possible (v7x megacore split on the parallel axis).
    half_rows = max(_SUBLANE, (pl.cdiv(rows, 2) // _SUBLANE) * _SUBLANE)
    rb = min(rb, half_rows)
    if rows < _SUBLANE:
        rb = rows  # degenerate tiny case: full-extent row block is always legal
    return rb, fb


def random_masking(xb, noise, mask_ratio=0.15):
    """Pallas implementation of RandomMasking.forward.

    xb:    (bs, L, nvars, D)
    noise: (bs, L) uniform randoms (plays the role of torch.rand(bs, L))
    returns (x_masked (bs, L, nvars, D), mask (bs, L, nvars) float32)
    """
    bs, L, nvars, D = xb.shape
    len_keep = int(L * (1 - mask_ratio))
    F = nvars * D
    rows = bs * L

    # --- keep flags + mask, computed once in plain JAX (identical to torch argsorts) ---
    ids_shuffle = jnp.argsort(noise, axis=1)
    ids_restore = jnp.argsort(ids_shuffle, axis=1)
    keep = ids_restore < len_keep                        # (bs, L) bool
    keep_rows = keep.reshape(rows, 1).astype(xb.dtype)   # per-row flag, lane dim = 1
    mask = jnp.broadcast_to(
        jnp.where(keep, 0.0, 1.0).astype(jnp.float32)[:, :, None], (bs, L, nvars)
    )

    # Lane-dense data layout: feature axis last.  Note: if F = nvars*D is not a multiple
    # of 128 in a deployment, keep fb == F (full-extent block, legal); only the lane tail
    # of each store is masked rather than every store being lane-narrow.
    x_flat = xb.reshape(rows, F)

    itemsize = jnp.dtype(xb.dtype).itemsize
    rb, fb = _pick_blocks(rows, F, itemsize)
    grid = (pl.cdiv(rows, rb), pl.cdiv(F, fb))

    cost = pl.CostEstimate(
        flops=rows * F,                                   # one select per element
        transcendentals=0,
        bytes_accessed=2 * rows * F * itemsize + rows * itemsize,
    )

    x_masked_flat = pl.pallas_call(
        _mask_select_kernel,
        out_shape=jax.ShapeDtypeStruct((rows, F), xb.dtype),
        grid_spec=pltpu.PrefetchScalarGridSpec(
            num_scalar_prefetch=0,
            grid=grid,
            in_specs=[
                pl.BlockSpec((rb, 1), lambda i, j: (i, 0)),    # keep flags (tiny)
                pl.BlockSpec((rb, fb), lambda i, j: (i, j)),   # x tile (lane-dense)
            ],
            out_specs=pl.BlockSpec((rb, fb), lambda i, j: (i, j)),
        ),
        input_output_aliases={1: 0},       # output reuses x_flat's buffer
        cost_estimate=cost,
        compiler_params=pltpu.CompilerParams(
            dimension_semantics=("parallel", "parallel"),
            vmem_limit_bytes=56 * 1024 * 1024,   # 2x(in)+2x(out) 12 MiB blocks fit v7x's 64 MiB
        ),
    )(keep_rows, x_flat)

    return x_masked_flat.reshape(bs, L, nvars, D), mask


if __name__ == "__main__":
    key = jax.random.PRNGKey(0)
    kx, kn = jax.random.split(key)

    bs, L, nvars, D = 2, 8, 4, 32
    mask_ratio = 0.15

    xb = jax.random.normal(kx, (bs, L, nvars, D), dtype=jnp.float32)
    # Randomness source: torch.rand inside forward() -> here a deterministic
    # jax.random.uniform generated in-script (same distribution / semantics).
    noise = jax.random.uniform(kn, (bs, L), dtype=jnp.float32)

    x_masked, mask = random_masking(xb, noise, mask_ratio)
    jax.block_until_ready((x_masked, mask))

    # Pure-JAX reference with identical semantics to the torch module (same noise).
    len_keep = int(L * (1 - mask_ratio))
    ids_shuffle = jnp.argsort(noise, axis=1)
    ids_restore = jnp.argsort(ids_shuffle, axis=1)
    keep_ref = ids_restore < len_keep                          # (bs, L)
    x_ref = jnp.where(keep_ref[:, :, None, None], xb, 0.0)
    m_ref = jnp.broadcast_to(jnp.where(keep_ref[:, :, None], 0.0, 1.0), (bs, L, nvars))

    assert x_masked.shape == (bs, L, nvars, D) and mask.shape == (bs, L, nvars)
    assert jnp.allclose(x_masked, x_ref), "x_masked mismatch vs reference"
    assert jnp.allclose(mask, m_ref), "mask mismatch vs reference"
    print("KERNEL_OK")
</pallas_src>

<mosaic_0001>
module attributes {stable_mosaic.version = 11 : i64} {
  func.func @_mask_select_kernel(%arg0: i32, %arg1: i32, %arg2: memref<8x1xf32, #tpu.memory_space<vmem>>, %arg3: memref<8x128xf32, #tpu.memory_space<vmem>>, %arg4: memref<8x128xf32, #tpu.memory_space<vmem>>) attributes {dimension_semantics = [#tpu.dimension_semantics<parallel>, #tpu.dimension_semantics<parallel>], iteration_bounds = array<i64: 2, 1>, scalar_prefetch = 0 : i64, scratch_operands = 0 : i64, tpu.core_type = #tpu.core_type<tc>, window_params = [{transform_indices = @transform_0, window_bounds = array<i64: 8, 1>}, {transform_indices = @transform_1, window_bounds = array<i64: 8, 128>}, {transform_indices = @transform_2, window_bounds = array<i64: 8, 128>}]} {
    %c0 = arith.constant 0 : index
    %c0_0 = arith.constant 0 : index
    %0 = vector.load %arg2[%c0, %c0_0] : memref<8x1xf32, #tpu.memory_space<vmem>>, vector<8x1xf32>
    %cst = arith.constant 0.000000e+00 : f32
    %1 = vector.broadcast %cst : f32 to vector<8x1xf32>
    %2 = arith.cmpf one, %0, %1 : vector<8x1xf32>
    %c0_1 = arith.constant 0 : index
    %c0_2 = arith.constant 0 : index
    %3 = vector.load %arg3[%c0_1, %c0_2] : memref<8x128xf32, #tpu.memory_space<vmem>>, vector<8x128xf32>
    %cst_3 = arith.constant 0.000000e+00 : f32
    %4 = vector.broadcast %cst_3 : f32 to vector<8x128xf32>
    %5 = vector.shape_cast %2 : vector<8x1xi1> to vector<8x1xi1>
    %6 = vector.broadcast %5 : vector<8x1xi1> to vector<8x128xi1>
    %7 = arith.select %6, %3, %4 : vector<8x128xi1>, vector<8x128xf32>
    %c0_4 = arith.constant 0 : index
    %c0_5 = arith.constant 0 : index
    %8 = vector.load %arg4[%c0_4, %c0_5] : memref<8x128xf32, #tpu.memory_space<vmem>>, vector<8x128xf32>
    tpu.vector_store %arg4[%c0_4, %c0_5], %7 {strides = array<i32>} : memref<8x128xf32, #tpu.memory_space<vmem>>, vector<8x128xf32>,
    return
  }
  func.func @transform_0(%arg0: i32, %arg1: i32) -> (i32, i32) {
    %c0_i32 = arith.constant 0 : i32
    %c0_i32_0 = arith.constant 0 : i32
    return %arg0, %c0_i32 : i32, i32
  }
  func.func @transform_1(%arg0: i32, %arg1: i32) -> (i32, i32) {
    %c0_i32 = arith.constant 0 : i32
    return %arg0, %arg1 : i32, i32
  }
  func.func @transform_2(%arg0: i32, %arg1: i32) -> (i32, i32) {
    %c0_i32 = arith.constant 0 : i32
    return %arg0, %arg1 : i32, i32
  }
}

</mosaic_0001>

<llo_original>
// kernel: tpu_custom_call.1
$region0: #{tpu_custom_call.1}
  #allocation0 [shape = 'u32[]', space=smem, size = 0x4, offset = 0x4, fixed_abs, tag = 'smem constant byte address 0x4 - core index']
  #allocation1 [shape = 'u32[144,128]{1,0:T(1,128)}', space=vmem, size = 0x12000, scoped, tag = 'internal scratch']
  %s0 = inlined_call_operand.vmem [shape: f32[16,1], index: 0, kind: input, shape index: {}]
  %s1 = inlined_call_operand.hbm [shape: f32[16,128], index: 1, kind: input, shape index: {}, may-alias: {1,2}]
  %s2 = inlined_call_operand.hbm [shape: f32[16,128], index: 2, kind: output, shape index: {}, may-alias: {1,2}]
  %s3 = sld [smem:[#allocation0]]
  $region45: #{tpu_custom_call.1} parent=0
    _
  %s5 = ssub.s32 1, %s3
  %s6 = scalar_select 0, %s5, %s3
  $region1: #{tpu_custom_call.1} parent=0
    #allocation2 [shape = 'u8[8192]{0}', space=vmem, size = 0x2000, scoped, tag = 'input window, operand 1']
    #allocation3 [shape = 's32[2]{0}', space=sflag, size = 0x8, scoped, tag = 'scoped memory for tpu_custom_call.1']
    #allocation4 [shape = 's32[2]{0}', space=sflag, size = 0x8, scoped, tag = 'scoped memory for tpu_custom_call.1']
    #allocation5 [shape = 'u8[8192]{0}', space=vmem, size = 0x2000, scoped, tag = 'output window, operand 0']
    %7 = vsyncpa [#allocation3], 0
    %s8 = scalar_lea.sflag [#allocation3], 1
    %9 = vsyncpa %s8, 0
    %10 = vsyncpa [#allocation4], 0
    %s11 = scalar_lea.sflag [#allocation4], 1
    %12 = vsyncpa %s11, 0
    loop: start=0, step=1, limit=4
    $region2: #{tpu_custom_call.1} parent=1 // loop_pre_header
      _
    $region3: #{tpu_custom_call.1} parent=1 // loop_header
      %s14 = sphi 0, %s18
      %p15 = scmp.ge.s32.totalorder %s14, 4
      %s21 = sphi 0, %s33
      %s22 = sphi 0, %s29
      %s23 = sphi 0, %s21
      %s24 = sphi 0, %s22
      %s25 = sphi 0, %s23
      %s26 = sphi 0, %s24
      %s36 = sphi 0, %s38
      %s39 = sphi 0, %s36
      %s40 = sphi 0, %s39
      %s56 = sphi 0, %s40
      %s64 = sphi 0, %s66
      %s67 = sphi 0, %s64
      %s68 = sphi 0, %s67
      %s84 = sphi 0, %s68
      %s92 = sphi 0, %s94
      %s95 = sphi 0, %s92
      %s96 = sphi 0, %s95
      %s112 = sphi 0, %s96
    $region4: #{tpu_custom_call.1} parent=1 // loop_header_branch
      %17 = sbr.rel (%p15) target = $region8
    $region5: #{tpu_custom_call.1} parent=1 // loop_body
      %s19 = ssub.s32 %s14, 1
      %s20 = ssub.s32 %s14, 2
      %s27 = sadd.s32 1, %s22
      %p28 = scmp.ge.s32.totalorder %s27, 1
      %s29 = scalar_select %p28, 0, %s27
      %s30 = sadd.s32 1, %s21
      %s31 = scalar_select %p28, %s30, %s21
      %p32 = scmp.ge.s32.totalorder %s31, 2
      %s33 = scalar_select %p32, 0, %s31
      %s34 = ssub.s32 %s21, %s33
      %p35 = scmp.eq.s32.totalorder %s34, 0
      %s37 = sadd.s32 %s36, 1
      %s38 = scalar_select %p35, %s36, %s37
      %p41 = pneg %p35
      %p42 = scmp.eq.s32.totalorder %s14, 1
      %p43 = por %p41, %p42
      %p44 = scmp.ne.s32.totalorder %s36, %s39
      %p45 = scmp.eq.s32.totalorder %s14, 0
      %p46 = por %p44, %p45
      %p47 = scmp.ne.s32.totalorder %s36, %s39
      %p48 = scmp.eq.s32.totalorder %s19, 1
      %p49 = por %p47, %p48
      %p50 = scmp.ne.s32.totalorder %s39, %s40
      %p51 = scmp.eq.s32.totalorder %s19, 0
      %p52 = por %p50, %p51
      %p53 = scmp.ne.s32.totalorder %s39, %s40
      %p54 = scmp.eq.s32.totalorder %s20, 1
      %p55 = por %p53, %p54
      %p57 = scmp.ne.s32.totalorder %s40, %s56
      %p58 = scmp.eq.s32.totalorder %s20, 0
      %p59 = por %p57, %p58
      %s60 = ssub.s32 %s21, %s33
      %s61 = ssub.s32 %s22, %s29
      %s62 = sor.u32 %s60, %s61
      %p63 = scmp.eq.s32.totalorder %s62, 0
      %s65 = sadd.s32 %s64, 1
      %s66 = scalar_select %p63, %s64, %s65
      %p69 = pneg %p63
      %p70 = scmp.eq.s32.totalorder %s14, 1
      %p71 = por %p69, %p70
      %p72 = scmp.ne.s32.totalorder %s64, %s67
      %p73 = scmp.eq.s32.totalorder %s14, 0
      %p74 = por %p72, %p73
      %p75 = scmp.ne.s32.totalorder %s64, %s67
      %p76 = scmp.eq.s32.totalorder %s19, 1
      %p77 = por %p75, %p76
      %p78 = scmp.ne.s32.totalorder %s67, %s68
      %p79 = scmp.eq.s32.totalorder %s19, 0
      %p80 = por %p78, %p79
      %p81 = scmp.ne.s32.totalorder %s67, %s68
      %p82 = scmp.eq.s32.totalorder %s20, 1
      %p83 = por %p81, %p82
      %p85 = scmp.ne.s32.totalorder %s68, %s84
      %p86 = scmp.eq.s32.totalorder %s20, 0
      %p87 = por %p85, %p86
      %s88 = ssub.s32 %s21, %s33
      %s89 = ssub.s32 %s22, %s29
      %s90 = sor.u32 %s88, %s89
      %p91 = scmp.eq.s32.totalorder %s90, 0
      %s93 = sadd.s32 %s92, 1
      %s94 = scalar_select %p91, %s92, %s93
      %p97 = pneg %p91
      %p98 = scmp.eq.s32.totalorder %s14, 1
      %p99 = por %p97, %p98
      %p100 = scmp.ne.s32.totalorder %s92, %s95
      %p101 = scmp.eq.s32.totalorder %s14, 0
      %p102 = por %p100, %p101
      %p103 = scmp.ne.s32.totalorder %s92, %s95
      %p104 = scmp.eq.s32.totalorder %s19, 1
      %p105 = por %p103, %p104
      %p106 = scmp.ne.s32.totalorder %s95, %s96
      %p107 = scmp.eq.s32.totalorder %s19, 0
      %p108 = por %p106, %p107
      %p109 = scmp.ne.s32.totalorder %s95, %s96
      %p110 = scmp.eq.s32.totalorder %s20, 1
      %p111 = por %p109, %p110
      %p113 = scmp.ne.s32.totalorder %s96, %s112
      %p114 = scmp.eq.s32.totalorder %s20, 0
      %p115 = por %p113, %p114
      %p116 = scmp.le.s32.totalorder 1, %s14
      %p117 = scmp.lt.s32.totalorder %s14, 3
      %p118 = pnand %p116, %p117
      %p119 = pneg %p118
      // Predicated region
      $region9: #{tpu_custom_call.1} parent=5 // pred_check
        _
      $region10: #{tpu_custom_call.1} parent=5 // pred_check_branch
        %121 = sbr.rel (%p118) target = $region12
      $region11: #{tpu_custom_call.1} parent=5 // pred_region
        %s122 = ssub.s32 %s14, 1
      $region12: #{tpu_custom_call.1} parent=5 // pred_fallthru
        _
      %p123 = scmp.lt.s32.totalorder %s14, 2
      // Predicated region
      $region13: #{tpu_custom_call.1} parent=5 // pred_check
        %p124 = pneg %p123
      $region14: #{tpu_custom_call.1} parent=5 // pred_check_branch
        %126 = sbr.rel (%p124) target = $region16
      $region15: #{tpu_custom_call.1} parent=5 // pred_region
        // Predicated region
        $region17: #{tpu_custom_call.1} parent=15 // pred_check
          %p127 = pneg %p46
        $region18: #{tpu_custom_call.1} parent=15 // pred_check_branch
          %129 = sbr.rel (%p127) target = $region20
        $region19: #{tpu_custom_call.1} parent=15 // pred_region
          %p130 = scmp.lt.s32.totalorder %s21, 1
          %s131 = scalar_select %p130, %s21, 1
          %s132 = smul.addr %s131, 8
          %s133 = scalar_lea.vmem %s0, %s132
        $region20: #{tpu_custom_call.1} parent=15 // pred_fallthru
          _
        // Predicated region
        $region21: #{tpu_custom_call.1} parent=15 // pred_check
          %p134 = pneg %p74
        $region22: #{tpu_custom_call.1} parent=15 // pred_check_branch
          %136 = sbr.rel (%p134) target = $region24
        $region23: #{tpu_custom_call.1} parent=15 // pred_region
          %s137 = sand.u32 %s64, 1
          %s138 = scalar_lea.sflag [#allocation3], %s137
          %s139 = sand.u32 %s64, 1
          %s140 = smul.addr %s139, 8
          %s141 = scalar_lea.vmem [#allocation2], %s140
          %s143 = ssub.s32 128, 128
          %144 = vsyncadd %s138, %s143
          %s145 = sadd.s32 %s22, %s21
          %s146 = smul.addr %s145, 128
          %s147 = scalar_lea.hbm %s1, %s146
          %s149 = sshll.u32 %s141, 4
          %s150 = int_to_ptr.vmem [resolvable:$true] %s149
          %152 = dma.hbm_to_vmem [thread:$0]  %s147, 128, %s150, %s138
        $region24: #{tpu_custom_call.1} parent=15 // pred_fallthru
          _
      $region16: #{tpu_custom_call.1} parent=5 // pred_fallthru
        _
      %p153 = scmp.le.s32.totalorder 1, %s14
      %p154 = scmp.lt.s32.totalorder %s14, 3
      %p155 = pnand %p153, %p154
      %p156 = pneg %p155
      // Predicated region
      $region25: #{tpu_custom_call.1} parent=5 // pred_check
        _
      $region26: #{tpu_custom_call.1} parent=5 // pred_check_branch
        %158 = sbr.rel (%p155) target = $region28
      $region27: #{tpu_custom_call.1} parent=5 // pred_region
        %s159 = ssub.s32 %s14, 1
        %s160 = sand.u32 %s67, 1
        %s161 = scalar_lea.sflag [#allocation3], %s160
        %s162 = sand.u32 %s67, 1
        %s163 = smul.addr %s162, 8
        %s164 = scalar_lea.vmem [#allocation2], %s163
        // Predicated region
        $region29: #{tpu_custom_call.1} parent=27 // pred_check
          %p165 = pneg %p80
        $region30: #{tpu_custom_call.1} parent=27 // pred_check_branch
          %167 = sbr.rel (%p165) target = $region32
        $region31: #{tpu_custom_call.1} parent=27 // pred_region
          %168 = dma.done %s161, 128
        $region32: #{tpu_custom_call.1} parent=27 // pred_fallthru
          _
        %p169 = scmp.lt.s32.totalorder %s23, 1
        %s170 = scalar_select %p169, %s23, 1
        %s171 = smul.addr %s170, 8
        %s172 = scalar_lea.vmem %s0, %s171
        %p173 = pneg %p52
        %p174 = pneg %p49
        %s175 = sand.u32 %s67, 1
        %s176 = scalar_lea.sflag [#allocation3], %s175
        %s177 = sand.u32 %s67, 1
        %s178 = smul.addr %s177, 8
        %s179 = scalar_lea.vmem [#allocation2], %s178
        %p180 = pneg %p80
        %p181 = pneg %p77
        %p182 = pneg %p108
        %p183 = pneg %p105
        %s184 = sand.u32 %s95, 1
        %s185 = scalar_lea.sflag [#allocation4], %s184
        %s186 = sand.u32 %s95, 1
        %s187 = smul.addr %s186, 8
        %s188 = scalar_lea.vmem [#allocation5], %s187
        %p189 = scmp.lt.s32.totalorder %s23, 1
        %s190 = scalar_select %p189, %s23, 1
        %s191 = smul.addr %s190, 8
        %s192 = scalar_lea.vmem %s0, %s191
        %v193 = vld [vmem:[%s192] sm:$0xff]
        %vm194 = vcmp.ne.f32.partialorder %v193, 0.0
        %v195 = vld [vmem:[%s164] sm:$0xff]
        %v196 = vsel %vm194, 1, 0
        %197 = vset.pattern.permute.xlu0 0
        %198 = vperm.xlu0 %197, %v196
        %v199 = vpop.permute.xlu0 %198
        %vm200 = vcmp.eq.s32.totalorder %v199, 1
        %v201 = vsel %vm200, %v195, 0.0
        %202 = vst [vmem:[%s188] sm:$0xff] %v201
        %s203 = sand.u32 %s95, 1
        %s204 = scalar_lea.sflag [#allocation4], %s203
        %s205 = sand.u32 %s95, 1
        %s206 = smul.addr %s205, 8
        %s207 = scalar_lea.vmem [#allocation5], %s206
        // Predicated region
        $region33: #{tpu_custom_call.1} parent=27 // pred_check
          %p208 = pneg %p105
        $region34: #{tpu_custom_call.1} parent=27 // pred_check_branch
          %210 = sbr.rel (%p208) target = $region36
        $region35: #{tpu_custom_call.1} parent=27 // pred_region
          %s212 = ssub.s32 128, 128
          %213 = vsyncadd %s204, %s212
          %s214 = sadd.s32 %s24, %s23
          %s215 = smul.addr %s214, 128
          %s216 = scalar_lea.hbm %s2, %s215
          %s218 = sshll.u32 %s207, 4
          %s219 = int_to_ptr.vmem [resolvable:$true] %s218
          %221 = dma.vmem_to_hbm [thread:$0]  %s219, 128, %s216, %s204
        $region36: #{tpu_custom_call.1} parent=27 // pred_fallthru
          _
      $region28: #{tpu_custom_call.1} parent=5 // pred_fallthru
        _
      %p222 = scmp.le.s32.totalorder 2, %s14
      // Predicated region
      $region37: #{tpu_custom_call.1} parent=5 // pred_check
        %p223 = pneg %p222
      $region38: #{tpu_custom_call.1} parent=5 // pred_check_branch
        %225 = sbr.rel (%p223) target = $region40
      $region39: #{tpu_custom_call.1} parent=5 // pred_region
        %s226 = ssub.s32 %s14, 2
        // Predicated region
        $region41: #{tpu_custom_call.1} parent=39 // pred_check
          %p227 = pneg %p111
        $region42: #{tpu_custom_call.1} parent=39 // pred_check_branch
          %229 = sbr.rel (%p227) target = $region44
        $region43: #{tpu_custom_call.1} parent=39 // pred_region
          %s230 = sand.u32 %s96, 1
          %s231 = scalar_lea.sflag [#allocation4], %s230
          %s232 = sand.u32 %s96, 1
          %s233 = smul.addr %s232, 8
          %s234 = scalar_lea.vmem [#allocation5], %s233
          %235 = dma.done %s231, 128
        $region44: #{tpu_custom_call.1} parent=39 // pred_fallthru
          _
      $region40: #{tpu_custom_call.1} parent=5 // pred_fallthru
        _
    $region6: #{tpu_custom_call.1} parent=1 // loop_footer
      %s18 = sadd.s32 1, %s14
    $region7: #{tpu_custom_call.1} parent=1 // loop_footer_branch
      %13 = sbr.rel target = $region3
    $region8: #{tpu_custom_call.1} parent=1 // loop_exit
      _
    %236 = vsyncpa [#allocation3], 1
    %s237 = scalar_lea.sflag [#allocation3], 1
    %238 = vsyncpa %s237, 1
    %239 = vsyncpa [#allocation4], 1
    %s240 = scalar_lea.sflag [#allocation4], 1
    %241 = vsyncpa %s240, 1

</llo_original>
